<compile_context>
chip_gen: v5e
topology: v5e:2x2
jax: 0.10.0
libtpu: 0.0.40
codegen_flags: <defaults>
</compile_context>

<pallas_src>
import jax
import jax.numpy as jnp
from jax.experimental import pallas as pl
from jax.experimental.pallas import tpu as pltpu

LANES = 128
SUBLANES = 8
THRESHOLD = 100.0  # k = torch.tensor(100); threshold > 0, so zero padding is safe.


def _round_up(v: int, m: int) -> int:
    return ((v + m - 1) // m) * m


def _build_kernel(valid_rows: int, tile_rows: int, inner_steps: int,
                  needs_row_mask: bool):
    """Kernel body with static shape/config baked in."""
    sub_blocks = tile_rows // SUBLANES

    def kernel(x_ref, part_ref):
        i = pl.program_id(1)

        # Zero the per-partition accumulator (resident output block) on the
        # first inner step.
        @pl.when(i == 0)
        def _():
            part_ref[...] = jnp.zeros_like(part_ref)

        x = x_ref[...].astype(jnp.float32)
        drop = x < jnp.float32(THRESHOLD)  # X_copy[X_copy < k] = 0

        if needs_row_mask:
            # Mask rows beyond the true extent (partially / fully OOB blocks).
            p = pl.program_id(0)
            row0 = (p * inner_steps + i) * tile_rows
            row_idx = row0 + jax.lax.broadcasted_iota(
                jnp.int32, (tile_rows, LANES), 0)
            drop = jnp.logical_or(drop, row_idx >= valid_rows)

        masked = jnp.where(drop, jnp.float32(0.0), x)
        # Lane/sublane-parallel partial sums: VPU adds only, no XLU reduction
        # on the hot path.  Final cross-lane reduce happens in the wrapper.
        part_ref[...] += masked.reshape(sub_blocks, SUBLANES, LANES).sum(axis=0)

    return kernel


def sparse_forward(x: jax.Array) -> jax.Array:
    """Equivalent of Sparse.forward: scalar mean of thresholded x."""
    total = x.size
    flat = jnp.ravel(x)  # native dtype; cast to f32 inside the kernel

    # Rarely taken: only if numel isn't a multiple of 128 do we pad (zeros are
    # safe because 0 < THRESHOLD, and we divide by the ORIGINAL element count).
    lane_pad = (-total) % LANES
    if lane_pad:
        flat = jnp.pad(flat, (0, lane_pad))
    rows = flat.size // LANES
    slab = flat.reshape(rows, LANES)

    # Block sizing: up to 1024 rows x 128 lanes.  f32 => 512 KiB per buffer,
    # ~1 MiB double-buffered -> comfortably within default scoped VMEM on
    # v5e/v6e/v7x while large enough to amortize per-grid-step overhead.
    tile_rows = min(1024, _round_up(rows, SUBLANES))
    num_blocks = pl.cdiv(rows, tile_rows)

    # Megacore / v7x dual-TC: split the reduction across a leading "parallel"
    # axis; each partition produces an (8, 128) partial sum.
    n_parts = 2 if num_blocks >= 2 else 1
    inner_steps = pl.cdiv(num_blocks, n_parts)

    needs_row_mask = (rows % tile_rows != 0) or (n_parts * inner_steps != num_blocks)
    kernel = _build_kernel(rows, tile_rows, inner_steps, needs_row_mask)

    def x_index_map(p, i):
        # Clamp so fully-out-of-range block indices re-read a valid block; the
        # in-kernel row mask zeroes their contribution.
        blk = p * inner_steps + i
        return (jnp.minimum(blk, num_blocks - 1), 0)

    partials = pl.pallas_call(
        kernel,
        out_shape=jax.ShapeDtypeStruct((n_parts, SUBLANES, LANES), jnp.float32),
        grid=(n_parts, inner_steps),
        in_specs=[pl.BlockSpec((tile_rows, LANES), x_index_map)],
        out_specs=pl.BlockSpec((None, SUBLANES, LANES), lambda p, i: (p, 0, 0)),
        compiler_params=pltpu.CompilerParams(
            dimension_semantics=("parallel", "arbitrary"),
        ),
    )(slab)

    # One-time cross-lane/partition reduction + mean scale (tiny, done in XLA).
    mean = jnp.sum(partials) / jnp.float32(total)
    out_dtype = x.dtype if jnp.issubdtype(x.dtype, jnp.floating) else jnp.float32
    return mean.astype(out_dtype)


def sparse_forward_ref(x: jax.Array) -> jax.Array:
    """Pure-JAX reference for correctness checking."""
    xc = jnp.where(x.astype(jnp.float32) < THRESHOLD, 0.0, x.astype(jnp.float32))
    return jnp.mean(xc)


if __name__ == "__main__":
    key = jax.random.PRNGKey(0)
    # NCHW input with values spanning the threshold so the mask is non-trivial.
    x = jax.random.uniform(key, (2, 4, 16, 16), dtype=jnp.float32,
                           minval=0.0, maxval=200.0)

    out = sparse_forward(x)
    out = jax.block_until_ready(out)

    ref = sparse_forward_ref(x)
    assert jnp.allclose(out, ref, rtol=1e-5, atol=1e-4), (out, ref)

    print("KERNEL_OK")
</pallas_src>

<mosaic_0001>
module attributes {stable_mosaic.version = 11 : i64} {
  func.func @kernel(%arg0: i32, %arg1: i32, %arg2: memref<16x128xf32, #tpu.memory_space<vmem>>, %arg3: memref<1x8x128xf32, #tpu.memory_space<vmem>>) attributes {dimension_semantics = [#tpu.dimension_semantics<parallel>, #tpu.dimension_semantics<arbitrary>], iteration_bounds = array<i64: 1, 1>, scalar_prefetch = 0 : i64, scratch_operands = 0 : i64, tpu.core_type = #tpu.core_type<tc>, window_params = [{transform_indices = @transform_0, window_bounds = array<i64: 16, 128>}, {transform_indices = @transform_1, window_bounds = array<i64: 1, 8, 128>}]} {
    %c0_i32 = arith.constant 0 : i32
    %0 = arith.cmpi eq, %arg1, %c0_i32 : i32
    %1 = arith.extui %0 : i1 to i32
    %c0_i32_0 = arith.constant 0 : i32
    %2 = arith.cmpi ne, %1, %c0_i32_0 : i32
    scf.if %2 {
      %cst_10 = arith.constant 0.000000e+00 : f32
      %16 = vector.broadcast %cst_10 : f32 to vector<8x128xf32>
      %c0_11 = arith.constant 0 : index
      %c0_12 = arith.constant 0 : index
      %c0_13 = arith.constant 0 : index
      %17 = vector.load %arg3[%c0_11, %c0_12, %c0_13] : memref<1x8x128xf32, #tpu.memory_space<vmem>>, vector<1x8x128xf32>
      %18 = vector.shape_cast %17 : vector<1x8x128xf32> to vector<8x128xf32>
      %19 = vector.shape_cast %16 : vector<8x128xf32> to vector<1x8x128xf32>
      tpu.vector_store %arg3[%c0_11, %c0_12, %c0_13], %19 {strides = array<i32>} : memref<1x8x128xf32, #tpu.memory_space<vmem>>, vector<1x8x128xf32>,
    } else {
    }
    %c0 = arith.constant 0 : index
    %c0_1 = arith.constant 0 : index
    %3 = vector.load %arg2[%c0, %c0_1] : memref<16x128xf32, #tpu.memory_space<vmem>>, vector<16x128xf32>
    %cst = arith.constant 1.000000e+02 : f32
    %4 = vector.broadcast %cst : f32 to vector<16x128xf32>
    %5 = arith.cmpf olt, %3, %4 : vector<16x128xf32>
    %cst_2 = arith.constant 0.000000e+00 : f32
    %6 = vector.broadcast %cst_2 : f32 to vector<16x128xf32>
    %7 = arith.select %5, %6, %3 : vector<16x128xi1>, vector<16x128xf32>
    %c0_3 = arith.constant 0 : index
    %c0_4 = arith.constant 0 : index
    %c0_5 = arith.constant 0 : index
    %8 = vector.load %arg3[%c0_3, %c0_4, %c0_5] : memref<1x8x128xf32, #tpu.memory_space<vmem>>, vector<1x8x128xf32>
    %9 = vector.shape_cast %8 : vector<1x8x128xf32> to vector<8x128xf32>
    %10 = vector.shape_cast %7 : vector<16x128xf32> to vector<2x8x128xf32>
    %cst_6 = arith.constant dense<0.000000e+00> : vector<8x128xf32>
    %11 = vector.multi_reduction <add>, %10, %cst_6 [0] : vector<2x8x128xf32> to vector<8x128xf32>
    %12 = arith.addf %9, %11 : vector<8x128xf32>
    %c0_7 = arith.constant 0 : index
    %c0_8 = arith.constant 0 : index
    %c0_9 = arith.constant 0 : index
    %13 = vector.load %arg3[%c0_7, %c0_8, %c0_9] : memref<1x8x128xf32, #tpu.memory_space<vmem>>, vector<1x8x128xf32>
    %14 = vector.shape_cast %13 : vector<1x8x128xf32> to vector<8x128xf32>
    %15 = vector.shape_cast %12 : vector<8x128xf32> to vector<1x8x128xf32>
    tpu.vector_store %arg3[%c0_7, %c0_8, %c0_9], %15 {strides = array<i32>} : memref<1x8x128xf32, #tpu.memory_space<vmem>>, vector<1x8x128xf32>,
    return
  }
  func.func @transform_0(%arg0: i32, %arg1: i32) -> (i32, i32) {
    %c1_i32 = arith.constant 1 : i32
    %0 = arith.muli %arg0, %c1_i32 : i32
    %1 = arith.addi %0, %arg1 : i32
    %c0_i32 = arith.constant 0 : i32
    %2 = arith.minsi %1, %c0_i32 : i32
    %c0_i32_0 = arith.constant 0 : i32
    %c0_i32_1 = arith.constant 0 : i32
    return %2, %c0_i32_0 : i32, i32
  }
  func.func @transform_1(%arg0: i32, %arg1: i32) -> (i32, i32, i32) {
    %c0_i32 = arith.constant 0 : i32
    %c0_i32_0 = arith.constant 0 : i32
    %c0_i32_1 = arith.constant 0 : i32
    return %arg0, %c0_i32, %c0_i32_0 : i32, i32, i32
  }
}

</mosaic_0001>

<llo_original>
// kernel: tpu_custom_call.1
$region0: #{tpu_custom_call.1}
  #allocation0 [shape = 'u32[]', space=smem, size = 0x4, offset = 0x4, fixed_abs, tag = 'smem constant byte address 0x4 - core index']
  #allocation1 [shape = 'u32[72,128]{1,0:T(1,128)}', space=vmem, size = 0x9000, scoped, tag = 'internal scratch']
  %s0 = inlined_call_operand.hbm [shape: f32[16,128], index: 0, kind: input, shape index: {}]
  %s1 = inlined_call_operand.hbm [shape: f32[1,8,128], index: 1, kind: output, shape index: {}]
  %s2 = sld [smem:[#allocation0]]
  $region22: #{tpu_custom_call.1} parent=0
    _
  %s4 = ssub.s32 1, %s2
  %s5 = scalar_select 0, %s4, %s2
  $region1: #{tpu_custom_call.1} parent=0
    #allocation2 [shape = 'u8[8192]{0}', space=vmem, size = 0x2000, scoped, tag = 'input window, operand 0, single buffered']
    #allocation3 [shape = 's32[1]{0}', space=sflag, size = 0x4, scoped, tag = 'scoped memory for tpu_custom_call.1']
    #allocation4 [shape = 's32[1]{0}', space=sflag, size = 0x4, scoped, tag = 'scoped memory for tpu_custom_call.1']
    #allocation5 [shape = 'u8[4096]{0}', space=vmem, size = 0x1000, scoped, tag = 'output window, operand 0, single buffered']
    %6 = vsyncpa [#allocation3], 0
    %7 = vsyncpa [#allocation4], 0
    // Predicated region
    $region2: #{tpu_custom_call.1} parent=1 // pred_check
      _
    $region3: #{tpu_custom_call.1} parent=1 // pred_check_branch
      %9 = sbr.rel (0) target = $region5
    $region4: #{tpu_custom_call.1} parent=1 // pred_region
      %s10 = sadd.s32 0, 0
      %p11 = scmp.lt.s32.totalorder %s10, 0
      %s12 = scalar_select %p11, %s10, 0
      %s13 = smul.u32 2, %s12
      %15 = vsyncadd [#allocation3], 0
      %s16 = smul.addr %s13, 8
      %s17 = scalar_lea.hbm %s0, %s16
      %s18 = sshll.u32 %s17, 4
      %s19 = int_to_ptr.hbm [resolvable:$true] %s18
      %s20 = sshll.u32 [#allocation2], 4
      %s21 = int_to_ptr.vmem [resolvable:$true] %s20
      %26 = dma.hbm_to_vmem [thread:$0]  %s19, 256, %s21, [#allocation3], 128, 128, 8
    $region5: #{tpu_custom_call.1} parent=1 // pred_fallthru
      _
    // Predicated region
    $region6: #{tpu_custom_call.1} parent=1 // pred_check
      _
    $region7: #{tpu_custom_call.1} parent=1 // pred_check_branch
      %28 = sbr.rel (0) target = $region9
    $region8: #{tpu_custom_call.1} parent=1 // pred_region
      %30 = dma.done [#allocation3], 256
    $region9: #{tpu_custom_call.1} parent=1 // pred_fallthru
      _
    %s31 = sadd.s32 0, 0
    %p32 = scmp.lt.s32.totalorder %s31, 0
    %s33 = scalar_select %p32, %s31, 0
    %s34 = smul.u32 2, %s33
    %p35 = scmp.eq.s32.totalorder 0, 0
    // Predicated region
    $region10: #{tpu_custom_call.1} parent=1 // pred_check
      %p36 = pneg %p35
    $region11: #{tpu_custom_call.1} parent=1 // pred_check_branch
      %38 = sbr.rel (%p36) target = $region13
    $region12: #{tpu_custom_call.1} parent=1 // pred_region
      %39 = vst [vmem:[#allocation5] sm:$0xff] 0.0
    $region13: #{tpu_custom_call.1} parent=1 // pred_fallthru
      _
    %v40 = vld [vmem:[#allocation2] sm:$0xff]
    %v41 = vld [vmem:[#allocation2 + $0x8] sm:$0xff]
    %vm42 = vcmp.lt.f32.partialorder %v40, 100.0
    %vm43 = vcmp.lt.f32.partialorder %v41, 100.0
    %v44 = vsel %vm42, 0.0, %v40
    %v45 = vsel %vm43, 0.0, %v41
    %v46 = vld [vmem:[#allocation5] sm:$0xff]
    %v47 = vadd.f32 %v44, %v45
    %v48 = vadd.f32 %v46, %v47
    %49 = vst [vmem:[#allocation5] sm:$0xff] %v48
    // Predicated region
    $region14: #{tpu_custom_call.1} parent=1 // pred_check
      _
    $region15: #{tpu_custom_call.1} parent=1 // pred_check_branch
      %51 = sbr.rel (0) target = $region17
    $region16: #{tpu_custom_call.1} parent=1 // pred_region
      %53 = vsyncadd [#allocation4], 0
      %s55 = sshll.u32 [#allocation5], 4
      %s56 = int_to_ptr.vmem [resolvable:$true] %s55
      %s57 = sshll.u32 %s1, 4
      %s58 = int_to_ptr.hbm [resolvable:$true] %s57
      %60 = dma.vmem_to_hbm [thread:$0]  %s56, 128, %s58, [#allocation4]
    $region17: #{tpu_custom_call.1} parent=1 // pred_fallthru
      _
    // Predicated region
    $region18: #{tpu_custom_call.1} parent=1 // pred_check
      _
    $region19: #{tpu_custom_call.1} parent=1 // pred_check_branch
      %62 = sbr.rel (0) target = $region21
    $region20: #{tpu_custom_call.1} parent=1 // pred_region
      %64 = dma.done [#allocation4], 128
    $region21: #{tpu_custom_call.1} parent=1 // pred_fallthru
      _
    %65 = vsyncpa [#allocation3], 1
    %66 = vsyncpa [#allocation4], 1

</llo_original>
